<compile_context>
chip_gen: v5e
topology: v5e:2x2
jax: 0.10.0
libtpu: 0.0.40
codegen_flags: <defaults>
</compile_context>

<pallas_src>
import jax
import jax.numpy as jnp
from jax import lax
from jax.experimental import pallas as pl
from jax.experimental.pallas import tpu as pltpu


def _round_up(n, m):
    return ((n + m - 1) // m) * m


def _vmem_capacity_bytes():
    try:
        return int(pltpu.get_tpu_info().vmem_capacity_bytes)
    except Exception:
        return 64 << 20  # conservative: v7x per-TC VMEM


# ---------------------------------------------------------------------------
# Fast path: resident weights, grid = (batch_tiles,), in-kernel layer loop.
# ---------------------------------------------------------------------------
def _resident_kernel(x_ref, w1_ref, b1_ref, whf_ref, bhf_ref,
                     wout_ref, bout_ref, o_ref):
    hp = w1_ref.shape[-1]
    nb_layers = whf_ref.shape[0]

    # first Linear + ReLU
    h0 = jnp.dot(x_ref[...], w1_ref[...],
                 preferred_element_type=jnp.float32) + b1_ref[...]
    h = jnp.maximum(h0, 0.0)

    def layer(l, carry):
        h_f32, h_bf16 = carry
        # fused [Hp, 2Hp] matmul: columns [:Hp] -> H path, [Hp:] -> T gate
        ht = jnp.dot(h_bf16, whf_ref[l],
                     preferred_element_type=jnp.float32) + bhf_ref[l]
        t = jax.nn.sigmoid(ht[:, hp:])        # T = sigmoid(x Wt + bt)
        hh = jnp.maximum(ht[:, :hp], 0.0)     # H = relu(x Wh + bh)
        h_new = h_f32 + t * (hh - h_f32)      # == H*T + x*(1 - T)
        return h_new, h_new.astype(jnp.bfloat16)

    h, h_bf16 = lax.fori_loop(0, nb_layers, layer,
                              (h, h.astype(jnp.bfloat16)))

    # final Linear + softmax (exact normalization)
    logits = jnp.dot(h_bf16, wout_ref[...],
                     preferred_element_type=jnp.float32) + bout_ref[...]
    m = jnp.max(logits, axis=-1, keepdims=True)
    e = jnp.exp(logits - m)
    o_ref[...] = e / jnp.sum(e, axis=-1, keepdims=True)


# ---------------------------------------------------------------------------
# Fallback path: per-layer streamed weights, grid = (batch_tiles, nb_layers).
# ---------------------------------------------------------------------------
def _streamed_kernel(x_ref, w1_ref, b1_ref, whf_ref, bhf_ref,
                     wout_ref, bout_ref, o_ref, h_ref, hb_ref):
    l = pl.program_id(1)
    hp = h_ref.shape[-1]

    @pl.when(l == 0)
    def _():
        h0 = jnp.dot(x_ref[...], w1_ref[...],
                     preferred_element_type=jnp.float32) + b1_ref[...]
        h0 = jnp.maximum(h0, 0.0)
        h_ref[...] = h0
        hb_ref[...] = h0.astype(jnp.bfloat16)

    ht = jnp.dot(hb_ref[...], whf_ref[0],
                 preferred_element_type=jnp.float32) + bhf_ref[0]
    h = h_ref[...]
    t = jax.nn.sigmoid(ht[:, hp:])
    hh = jnp.maximum(ht[:, :hp], 0.0)
    h_new = h + t * (hh - h)
    h_ref[...] = h_new
    hb_ref[...] = h_new.astype(jnp.bfloat16)

    @pl.when(l == pl.num_programs(1) - 1)
    def _():
        logits = jnp.dot(hb_ref[...], wout_ref[...],
                         preferred_element_type=jnp.float32) + bout_ref[...]
        m = jnp.max(logits, axis=-1, keepdims=True)
        e = jnp.exp(logits - m)
        o_ref[...] = e / jnp.sum(e, axis=-1, keepdims=True)


def highway_deep_forward(x, params, nb_layers):
    """x: [B, D_in] float32; params in PyTorch layout ([out, in] weights)."""
    B, d_in = x.shape
    H = params["w1"].shape[0]
    d_out = params["wout"].shape[0]

    din_p = _round_up(d_in, 128)
    # 256-aligned H feeds the 2x256^2 MXUs of v6e/v7x at full contraction
    # depth; H <= 128 stays at 128 (recover throughput via the batch tile).
    hp = 128 if H <= 128 else _round_up(H, 256)
    dout_p = _round_up(d_out, 128)

    # batch tile: bf16 packs 16 rows per vreg -> multiples of 16 for small B;
    # 256/512 for large B (amortize weight traffic past machine balance) while
    # keeping >= 2 tiles so the "parallel" axis spreads over v7x's two TCs.
    if B <= 256:
        tb = _round_up(B, 16)
    elif B < 1024:
        tb = 256
    else:
        tb = 512
    b_pad = _round_up(B, tb)
    n_tiles = b_pad // tb

    # ---- layout plumbing: pad to lane-dense shapes, pre-transpose to
    # [in, out], fuse (Wh, Wt) -> [Hp, 2Hp], bf16 matmul operands ------------
    xp = jnp.pad(x, ((0, b_pad - B), (0, din_p - d_in))).astype(jnp.bfloat16)

    w1 = jnp.pad(params["w1"].T,
                 ((0, din_p - d_in), (0, hp - H))).astype(jnp.bfloat16)
    b1 = jnp.pad(params["b1"], ((0, 0), (0, hp - H)))

    wh_t = jnp.pad(jnp.transpose(params["wh"], (0, 2, 1)),
                   ((0, 0), (0, hp - H), (0, hp - H)))
    wt_t = jnp.pad(jnp.transpose(params["wt"], (0, 2, 1)),
                   ((0, 0), (0, hp - H), (0, hp - H)))
    whf = jnp.concatenate([wh_t, wt_t], axis=-1).astype(jnp.bfloat16)  # [L,Hp,2Hp]
    bh = jnp.pad(params["bh"], ((0, 0), (0, 0), (0, hp - H)))
    bt = jnp.pad(params["bt"], ((0, 0), (0, 0), (0, hp - H)))
    bhf = jnp.concatenate([bh, bt], axis=-1)                           # [L,1,2Hp]

    wout = jnp.pad(params["wout"].T,
                   ((0, hp - H), (0, dout_p - d_out))).astype(jnp.bfloat16)
    # padded logit lanes get a huge negative bias so softmax ignores them
    # (safe because padded h lanes and padded wout columns are exactly zero)
    bout = jnp.pad(params["bout"], ((0, 0), (0, dout_p - d_out)),
                   constant_values=-1e30)

    # ---- VMEM budgeting: resident weight stack vs per-layer streaming ------
    BF16, F32 = 2, 4
    x_blk = tb * din_p * BF16
    o_blk = tb * dout_p * F32
    fixed_w = din_p * hp * BF16 + hp * F32 + hp * dout_p * BF16 + dout_p * F32
    whf_all = nb_layers * hp * 2 * hp * BF16 + nb_layers * 2 * hp * F32
    whf_one = hp * 2 * hp * BF16 + 2 * hp * F32
    work = tb * hp * (F32 + BF16) + 3 * tb * 2 * hp * F32 + tb * dout_p * F32

    cap = _vmem_capacity_bytes()
    budget = int(cap * 0.75)
    resident_need = 2 * (x_blk + o_blk + fixed_w + whf_all) + work
    streamed_need = (2 * (x_blk + o_blk + fixed_w + whf_one)
                     + tb * hp * (F32 + BF16) + work)

    if resident_need <= budget:
        vmem_limit = int(min(cap - (4 << 20),
                             max(resident_need + (8 << 20), 32 << 20)))
        out = pl.pallas_call(
            _resident_kernel,
            out_shape=jax.ShapeDtypeStruct((b_pad, dout_p), jnp.float32),
            grid=(n_tiles,),
            in_specs=[
                pl.BlockSpec((tb, din_p), lambda i: (i, 0)),                 # x
                pl.BlockSpec((din_p, hp), lambda i: (0, 0)),                 # w1
                pl.BlockSpec((1, hp), lambda i: (0, 0)),                     # b1
                pl.BlockSpec((nb_layers, hp, 2 * hp), lambda i: (0, 0, 0)),  # whf
                pl.BlockSpec((nb_layers, 1, 2 * hp), lambda i: (0, 0, 0)),   # bhf
                pl.BlockSpec((hp, dout_p), lambda i: (0, 0)),                # wout
                pl.BlockSpec((1, dout_p), lambda i: (0, 0)),                 # bout
            ],
            out_specs=pl.BlockSpec((tb, dout_p), lambda i: (i, 0)),
            compiler_params=pltpu.CompilerParams(
                dimension_semantics=("parallel",),
                vmem_limit_bytes=vmem_limit),
        )(xp, w1, b1, whf, bhf, wout, bout)
    else:
        # TODO(synk): for very large H the per-layer [Hp, 2Hp] block itself may
        # exceed VMEM; would need K/N tiling of the fused highway matmul.
        vmem_limit = int(min(cap - (4 << 20),
                             max(streamed_need + (8 << 20), 32 << 20)))
        out = pl.pallas_call(
            _streamed_kernel,
            out_shape=jax.ShapeDtypeStruct((b_pad, dout_p), jnp.float32),
            grid=(n_tiles, nb_layers),
            in_specs=[
                pl.BlockSpec((tb, din_p), lambda i, l: (i, 0)),              # x
                pl.BlockSpec((din_p, hp), lambda i, l: (0, 0)),              # w1
                pl.BlockSpec((1, hp), lambda i, l: (0, 0)),                  # b1
                pl.BlockSpec((1, hp, 2 * hp), lambda i, l: (l, 0, 0)),       # whf
                pl.BlockSpec((1, 1, 2 * hp), lambda i, l: (l, 0, 0)),        # bhf
                pl.BlockSpec((hp, dout_p), lambda i, l: (0, 0)),             # wout
                pl.BlockSpec((1, dout_p), lambda i, l: (0, 0)),              # bout
            ],
            out_specs=pl.BlockSpec((tb, dout_p), lambda i, l: (i, 0)),
            scratch_shapes=[pltpu.VMEM((tb, hp), jnp.float32),               # h
                            pltpu.VMEM((tb, hp), jnp.bfloat16)],             # h bf16
            compiler_params=pltpu.CompilerParams(
                dimension_semantics=("parallel", "arbitrary"),
                vmem_limit_bytes=vmem_limit),
        )(xp, w1, b1, whf, bhf, wout, bout)

    return out[:B, :d_out]


def init_params(key, input_shape, hidden_shape, output_shape, nb_layers):
    """PyTorch-layout parameters ([out, in] weights)."""
    ks = jax.random.split(key, 10)

    # first Linear: xavier_normal weight, default-uniform bias
    xavier_std = (2.0 / (input_shape + hidden_shape)) ** 0.5
    w1 = xavier_std * jax.random.normal(ks[0], (hidden_shape, input_shape),
                                        jnp.float32)
    bnd1 = 1.0 / (input_shape ** 0.5)
    b1 = jax.random.uniform(ks[1], (1, hidden_shape), jnp.float32, -bnd1, bnd1)

    # highway layers (stacked): [L, H, H] weights, [L, 1, H] biases
    bnd_h = 1.0 / (hidden_shape ** 0.5)
    wh = jax.random.uniform(ks[2], (nb_layers, hidden_shape, hidden_shape),
                            jnp.float32, -bnd_h, bnd_h)
    bh = jax.random.uniform(ks[3], (nb_layers, 1, hidden_shape),
                            jnp.float32, -bnd_h, bnd_h)
    wt = jax.random.uniform(ks[4], (nb_layers, hidden_shape, hidden_shape),
                            jnp.float32, -bnd_h, bnd_h)
    bt = jnp.full((nb_layers, 1, hidden_shape), -1.0, jnp.float32) + \
         jax.random.uniform(ks[5], (nb_layers, 1, hidden_shape),
                            jnp.float32, -bnd_h, bnd_h)

    # output Linear
    wout = jax.random.uniform(ks[6], (output_shape, hidden_shape),
                              jnp.float32, -bnd_h, bnd_h)
    bout = jax.random.uniform(ks[7], (1, output_shape),
                              jnp.float32, -bnd_h, bnd_h)

    return dict(w1=w1, b1=b1, wh=wh, bh=bh, wt=wt, bt=bt, wout=wout, bout=bout)


def reference_forward(x, p, nb_layers, matmul_dtype=jnp.float32):
    """Pure-JAX reference.  matmul_dtype=bf16 mirrors the kernel's precision."""
    def mm(a, w):
        return jnp.dot(a.astype(matmul_dtype), w.T.astype(matmul_dtype),
                       preferred_element_type=jnp.float32)
    h = jnp.maximum(mm(x, p["w1"]) + p["b1"], 0.0)
    for l in range(nb_layers):
        hh = jnp.maximum(mm(h, p["wh"][l]) + p["bh"][l], 0.0)
        t = jax.nn.sigmoid(mm(h, p["wt"][l]) + p["bt"][l])
        h = h + t * (hh - h)
    logits = mm(h, p["wout"]) + p["bout"]
    return jax.nn.softmax(logits, axis=-1)


if __name__ == "__main__":
    B, D_IN, HIDDEN, D_OUT, NB_LAYERS = 8, 16, 32, 8, 3

    key = jax.random.PRNGKey(0)
    kx, kp = jax.random.split(key)
    x = jax.random.normal(kx, (B, D_IN), jnp.float32)
    params = init_params(kp, D_IN, HIDDEN, D_OUT, NB_LAYERS)

    y = highway_deep_forward(x, params, NB_LAYERS)
    y = jax.block_until_ready(y)

    # matched-precision reference (bf16 matmuls) -> tight tolerance
    y_bf16 = reference_forward(x, params, NB_LAYERS, matmul_dtype=jnp.bfloat16)
    # pure f32 reference -> loose sanity tolerance (bf16 perturbs results)
    y_f32 = reference_forward(x, params, NB_LAYERS, matmul_dtype=jnp.float32)

    assert y.shape == (B, D_OUT)
    assert jnp.allclose(y, y_bf16, atol=2e-3, rtol=2e-3)
    assert jnp.allclose(y, y_f32, atol=3e-2, rtol=3e-2)
    assert jnp.allclose(jnp.sum(y, axis=-1), 1.0, atol=1e-3)

    print("KERNEL_OK")
</pallas_src>

<mosaic_0001>
module attributes {stable_mosaic.version = 11 : i64} {
  func.func @_resident_kernel(%arg0: i32, %arg1: memref<16x128xbf16, #tpu.memory_space<vmem>>, %arg2: memref<128x128xbf16, #tpu.memory_space<vmem>>, %arg3: memref<1x128xf32, #tpu.memory_space<vmem>>, %arg4: memref<3x128x256xbf16, #tpu.memory_space<vmem>>, %arg5: memref<3x1x256xf32, #tpu.memory_space<vmem>>, %arg6: memref<128x128xbf16, #tpu.memory_space<vmem>>, %arg7: memref<1x128xf32, #tpu.memory_space<vmem>>, %arg8: memref<16x128xf32, #tpu.memory_space<vmem>>) attributes {dimension_semantics = [#tpu.dimension_semantics<parallel>], iteration_bounds = array<i64: 1>, scalar_prefetch = 0 : i64, scratch_operands = 0 : i64, tpu.core_type = #tpu.core_type<tc>, window_params = [{transform_indices = @transform_0, window_bounds = array<i64: 16, 128>}, {pipeline_mode = #tpu.pipeline_mode<synchronous>, transform_indices = @transform_1, window_bounds = array<i64: 128, 128>}, {pipeline_mode = #tpu.pipeline_mode<synchronous>, transform_indices = @transform_2, window_bounds = array<i64: 1, 128>}, {pipeline_mode = #tpu.pipeline_mode<synchronous>, transform_indices = @transform_3, window_bounds = array<i64: 3, 128, 256>}, {pipeline_mode = #tpu.pipeline_mode<synchronous>, transform_indices = @transform_4, window_bounds = array<i64: 3, 1, 256>}, {pipeline_mode = #tpu.pipeline_mode<synchronous>, transform_indices = @transform_5, window_bounds = array<i64: 128, 128>}, {pipeline_mode = #tpu.pipeline_mode<synchronous>, transform_indices = @transform_6, window_bounds = array<i64: 1, 128>}, {transform_indices = @transform_7, window_bounds = array<i64: 16, 128>}]} {
    %c0 = arith.constant 0 : index
    %c0_0 = arith.constant 0 : index
    %0 = vector.load %arg1[%c0, %c0_0] : memref<16x128xbf16, #tpu.memory_space<vmem>>, vector<16x128xbf16>
    %c0_1 = arith.constant 0 : index
    %c0_2 = arith.constant 0 : index
    %1 = vector.load %arg2[%c0_1, %c0_2] : memref<128x128xbf16, #tpu.memory_space<vmem>>, vector<128x128xbf16>
    %cst = arith.constant dense<0.000000e+00> : vector<16x128xf32>
    %2 = tpu.matmul %0, %1, %cst {dimension_numbers = #tpu.dot_dimension_numbers<[1], [0], [0], [1], [0, 0, 1, 1], [], []>} : vector<16x128xbf16>, vector<128x128xbf16>, vector<16x128xf32> -> vector<16x128xf32>
    %c0_3 = arith.constant 0 : index
    %c0_4 = arith.constant 0 : index
    %3 = vector.load %arg3[%c0_3, %c0_4] : memref<1x128xf32, #tpu.memory_space<vmem>>, vector<1x128xf32>
    %4 = vector.broadcast %3 : vector<1x128xf32> to vector<16x128xf32>
    %5 = arith.addf %2, %4 : vector<16x128xf32>
    %cst_5 = arith.constant 0.000000e+00 : f32
    %6 = vector.broadcast %cst_5 : f32 to vector<16x128xf32>
    %7 = arith.maximumf %5, %6 : vector<16x128xf32>
    %8 = arith.truncf %7 : vector<16x128xf32> to vector<16x128xbf16>
    %c0_i32 = arith.constant 0 : i32
    %c3_i32 = arith.constant 3 : i32
    %9 = arith.addi %c0_i32, %c3_i32 : i32
    %c1_i32 = arith.constant 1 : i32
    %10:2 = scf.for %arg9 = %c0_i32 to %9 step %c1_i32 iter_args(%arg10 = %7, %arg11 = %8) -> (vector<16x128xf32>, vector<16x128xbf16>)  : i32 {
      %26 = arith.index_cast %arg9 : i32 to index
      %c0_16 = arith.constant 0 : index
      %c0_17 = arith.constant 0 : index
      %27 = vector.load %arg4[%26, %c0_16, %c0_17] : memref<3x128x256xbf16, #tpu.memory_space<vmem>>, vector<1x128x256xbf16>
      %28 = vector.shape_cast %27 : vector<1x128x256xbf16> to vector<128x256xbf16>
      %cst_18 = arith.constant dense<0.000000e+00> : vector<16x256xf32>
      %29 = tpu.matmul %arg11, %28, %cst_18 {dimension_numbers = #tpu.dot_dimension_numbers<[1], [0], [0], [1], [0, 0, 1, 1], [], []>} : vector<16x128xbf16>, vector<128x256xbf16>, vector<16x256xf32> -> vector<16x256xf32>
      %30 = arith.index_cast %arg9 : i32 to index
      %c0_19 = arith.constant 0 : index
      %c0_20 = arith.constant 0 : index
      %31 = vector.load %arg5[%30, %c0_19, %c0_20] : memref<3x1x256xf32, #tpu.memory_space<vmem>>, vector<1x1x256xf32>
      %32 = vector.shape_cast %31 : vector<1x1x256xf32> to vector<1x256xf32>
      %33 = vector.broadcast %32 : vector<1x256xf32> to vector<16x256xf32>
      %34 = arith.addf %29, %33 : vector<16x256xf32>
      %35 = vector.extract_strided_slice %34 {offsets = [0, 128], sizes = [16, 128], strides = [1, 1]} : vector<16x256xf32> to vector<16x128xf32>
      %36 = arith.negf %35 : vector<16x128xf32>
      %37 = math.exp %36 : vector<16x128xf32>
      %cst_21 = arith.constant 1.000000e+00 : f32
      %38 = vector.broadcast %cst_21 : f32 to vector<16x128xf32>
      %39 = arith.addf %38, %37 : vector<16x128xf32>
      %40 = arith.divf %38, %39 : vector<16x128xf32>
      %41 = vector.extract_strided_slice %34 {offsets = [0, 0], sizes = [16, 128], strides = [1, 1]} : vector<16x256xf32> to vector<16x128xf32>
      %cst_22 = arith.constant 0.000000e+00 : f32
      %42 = vector.broadcast %cst_22 : f32 to vector<16x128xf32>
      %43 = arith.maximumf %41, %42 : vector<16x128xf32>
      %44 = arith.subf %43, %arg10 : vector<16x128xf32>
      %45 = arith.mulf %40, %44 : vector<16x128xf32>
      %46 = arith.addf %arg10, %45 : vector<16x128xf32>
      %47 = arith.truncf %46 : vector<16x128xf32> to vector<16x128xbf16>
      scf.yield %46, %47 : vector<16x128xf32>, vector<16x128xbf16>
    }
    %c3_i32_6 = arith.constant 3 : i32
    %c0_7 = arith.constant 0 : index
    %c0_8 = arith.constant 0 : index
    %11 = vector.load %arg6[%c0_7, %c0_8] : memref<128x128xbf16, #tpu.memory_space<vmem>>, vector<128x128xbf16>
    %cst_9 = arith.constant dense<0.000000e+00> : vector<16x128xf32>
    %12 = tpu.matmul %10#1, %11, %cst_9 {dimension_numbers = #tpu.dot_dimension_numbers<[1], [0], [0], [1], [0, 0, 1, 1], [], []>} : vector<16x128xbf16>, vector<128x128xbf16>, vector<16x128xf32> -> vector<16x128xf32>
    %c0_10 = arith.constant 0 : index
    %c0_11 = arith.constant 0 : index
    %13 = vector.load %arg7[%c0_10, %c0_11] : memref<1x128xf32, #tpu.memory_space<vmem>>, vector<1x128xf32>
    %14 = vector.broadcast %13 : vector<1x128xf32> to vector<16x128xf32>
    %15 = arith.addf %12, %14 : vector<16x128xf32>
    %cst_12 = arith.constant dense<0xFF800000> : vector<16xf32>
    %16 = vector.multi_reduction <maximumf>, %15, %cst_12 [1] : vector<16x128xf32> to vector<16xf32>
    %17 = vector.shape_cast %16 : vector<16xf32> to vector<16x1xf32>
    %18 = vector.broadcast %17 : vector<16x1xf32> to vector<16x128xf32>
    %19 = arith.subf %15, %18 : vector<16x128xf32>
    %20 = math.exp %19 : vector<16x128xf32>
    %cst_13 = arith.constant dense<0.000000e+00> : vector<16xf32>
    %21 = vector.multi_reduction <add>, %20, %cst_13 [1] : vector<16x128xf32> to vector<16xf32>
    %22 = vector.shape_cast %21 : vector<16xf32> to vector<16x1xf32>
    %23 = vector.broadcast %22 : vector<16x1xf32> to vector<16x128xf32>
    %24 = arith.divf %20, %23 : vector<16x128xf32>
    %c0_14 = arith.constant 0 : index
    %c0_15 = arith.constant 0 : index
    %25 = vector.load %arg8[%c0_14, %c0_15] : memref<16x128xf32, #tpu.memory_space<vmem>>, vector<16x128xf32>
    tpu.vector_store %arg8[%c0_14, %c0_15], %24 {strides = array<i32>} : memref<16x128xf32, #tpu.memory_space<vmem>>, vector<16x128xf32>,
    return
  }
  func.func @transform_0(%arg0: i32) -> (i32, i32) {
    %c0_i32 = arith.constant 0 : i32
    %c0_i32_0 = arith.constant 0 : i32
    return %arg0, %c0_i32 : i32, i32
  }
  func.func @transform_1(%arg0: i32) -> (i32, i32) {
    %c0_i32 = arith.constant 0 : i32
    %c0_i32_0 = arith.constant 0 : i32
    %c0_i32_1 = arith.constant 0 : i32
    return %c0_i32, %c0_i32_0 : i32, i32
  }
  func.func @transform_2(%arg0: i32) -> (i32, i32) {
    %c0_i32 = arith.constant 0 : i32
    %c0_i32_0 = arith.constant 0 : i32
    %c0_i32_1 = arith.constant 0 : i32
    return %c0_i32, %c0_i32_0 : i32, i32
  }
  func.func @transform_3(%arg0: i32) -> (i32, i32, i32) {
    %c0_i32 = arith.constant 0 : i32
    %c0_i32_0 = arith.constant 0 : i32
    %c0_i32_1 = arith.constant 0 : i32
    %c0_i32_2 = arith.constant 0 : i32
    return %c0_i32, %c0_i32_0, %c0_i32_1 : i32, i32, i32
  }
  func.func @transform_4(%arg0: i32) -> (i32, i32, i32) {
    %c0_i32 = arith.constant 0 : i32
    %c0_i32_0 = arith.constant 0 : i32
    %c0_i32_1 = arith.constant 0 : i32
    %c0_i32_2 = arith.constant 0 : i32
    return %c0_i32, %c0_i32_0, %c0_i32_1 : i32, i32, i32
  }
  func.func @transform_5(%arg0: i32) -> (i32, i32) {
    %c0_i32 = arith.constant 0 : i32
    %c0_i32_0 = arith.constant 0 : i32
    %c0_i32_1 = arith.constant 0 : i32
    return %c0_i32, %c0_i32_0 : i32, i32
  }
  func.func @transform_6(%arg0: i32) -> (i32, i32) {
    %c0_i32 = arith.constant 0 : i32
    %c0_i32_0 = arith.constant 0 : i32
    %c0_i32_1 = arith.constant 0 : i32
    return %c0_i32, %c0_i32_0 : i32, i32
  }
  func.func @transform_7(%arg0: i32) -> (i32, i32) {
    %c0_i32 = arith.constant 0 : i32
    %c0_i32_0 = arith.constant 0 : i32
    return %arg0, %c0_i32 : i32, i32
  }
}

</mosaic_0001>

<llo_original>
// kernel: tpu_custom_call.1
$region0: #{tpu_custom_call.1}
  #allocation0 [shape = 'u32[]', space=smem, size = 0x4, offset = 0x4, fixed_abs, tag = 'smem constant byte address 0x4 - core index']
  #allocation1 [shape = 'u32[72,128]{1,0:T(1,128)}', space=vmem, size = 0x9000, scoped, tag = 'internal scratch']
  %s0 = inlined_call_operand.hbm [shape: bf16[16,128], index: 0, kind: input, shape index: {}]
  %s1 = inlined_call_operand.hbm [shape: bf16[128,128], index: 1, kind: input, shape index: {}]
  %s2 = inlined_call_operand.vmem [shape: f32[1,128], index: 2, kind: input, shape index: {}]
  %s3 = inlined_call_operand.hbm [shape: bf16[3,128,256], index: 3, kind: input, shape index: {}]
  %s4 = inlined_call_operand.hbm [shape: f32[3,1,256], index: 4, kind: input, shape index: {}]
  %s5 = inlined_call_operand.hbm [shape: bf16[128,128], index: 5, kind: input, shape index: {}]
  %s6 = inlined_call_operand.vmem [shape: f32[1,128], index: 6, kind: input, shape index: {}]
  %s7 = inlined_call_operand.hbm [shape: f32[16,128], index: 7, kind: output, shape index: {}]
  %s8 = sld [smem:[#allocation0]]
  $region65: #{tpu_custom_call.1} parent=0
    _
  %s10 = ssub.s32 1, %s8
  %s11 = scalar_select 0, %s10, %s8
  $region1: #{tpu_custom_call.1} parent=0
    #allocation2 [shape = 'u8[4096]{0}', space=vmem, size = 0x1000, scoped, tag = 'input window, operand 0, single buffered']
    #allocation3 [shape = 's32[1]{0}', space=sflag, size = 0x4, scoped, tag = 'scoped memory for tpu_custom_call.1']
    #allocation4 [shape = 's32[1]{0}', space=sflag, size = 0x4, scoped, tag = 'scoped memory for tpu_custom_call.1']
    #allocation5 [shape = 'u8[32768]{0}', space=vmem, size = 0x8000, scoped, tag = 'input window, operand 1, single buffered']
    #allocation6 [shape = 's32[1]{0}', space=sflag, size = 0x4, scoped, tag = 'scoped memory for tpu_custom_call.1']
    #allocation7 [shape = 'u8[196608]{0}', space=vmem, size = 0x30000, scoped, tag = 'input window, operand 3, single buffered']
    #allocation8 [shape = 'u8[3072]{0}', space=vmem, size = 0xc00, scoped, tag = 'input window, operand 4, single buffered']
    #allocation9 [shape = 's32[1]{0}', space=sflag, size = 0x4, scoped, tag = 'scoped memory for tpu_custom_call.1']
    #allocation10 [shape = 'u8[32768]{0}', space=vmem, size = 0x8000, scoped, tag = 'input window, operand 5, single buffered']
    #allocation11 [shape = 'u8[8192]{0}', space=vmem, size = 0x2000, scoped, tag = 'output window, operand 0, single buffered']
    %12 = vsyncpa [#allocation3], 0
    %13 = vsyncpa [#allocation6], 0
    %14 = vsyncpa [#allocation9], 0
    %15 = vsyncpa [#allocation4], 0
    // Predicated region
    $region2: #{tpu_custom_call.1} parent=1 // pred_check
      _
    $region3: #{tpu_custom_call.1} parent=1 // pred_check_branch
      %17 = sbr.rel (0) target = $region5
    $region4: #{tpu_custom_call.1} parent=1 // pred_region
      %19 = vsyncadd [#allocation3], 0
      %s20 = sshll.u32 %s0, 4
      %s21 = int_to_ptr.hbm [resolvable:$true] %s20
      %s22 = sshll.u32 [#allocation2], 4
      %s23 = int_to_ptr.vmem [resolvable:$true] %s22
      %28 = dma.hbm_to_vmem [thread:$0]  %s21, 128, %s23, [#allocation3], 64, 64, 4
    $region5: #{tpu_custom_call.1} parent=1 // pred_fallthru
      _
    // Predicated region
    $region6: #{tpu_custom_call.1} parent=1 // pred_check
      _
    $region7: #{tpu_custom_call.1} parent=1 // pred_check_branch
      %30 = sbr.rel (0) target = $region9
    $region8: #{tpu_custom_call.1} parent=1 // pred_region
      %32 = vsyncadd [#allocation6], 0
      %s33 = sshll.u32 %s1, 4
      %s34 = int_to_ptr.hbm [resolvable:$true] %s33
      %s35 = sshll.u32 [#allocation5], 4
      %s36 = int_to_ptr.vmem [resolvable:$true] %s35
      %41 = dma.hbm_to_vmem [thread:$0]  %s34, 1024, %s36, [#allocation6], 64, 64, 4
    $region9: #{tpu_custom_call.1} parent=1 // pred_fallthru
      _
    // Predicated region
    $region10: #{tpu_custom_call.1} parent=1 // pred_check
      _
    $region11: #{tpu_custom_call.1} parent=1 // pred_check_branch
      %43 = sbr.rel (0) target = $region13
    $region12: #{tpu_custom_call.1} parent=1 // pred_region
      _
    $region13: #{tpu_custom_call.1} parent=1 // pred_fallthru
      _
    // Predicated region
    $region14: #{tpu_custom_call.1} parent=1 // pred_check
      _
    $region15: #{tpu_custom_call.1} parent=1 // pred_check_branch
      %45 = sbr.rel (0) target = $region17
    $region16: #{tpu_custom_call.1} parent=1 // pred_region
      %47 = vsyncadd [#allocation6], 0
      %s48 = sshll.u32 %s3, 4
      %s49 = int_to_ptr.hbm [resolvable:$true] %s48
      %s50 = sshll.u32 [#allocation7], 4
      %s51 = int_to_ptr.vmem [resolvable:$true] %s50
      %56 = dma.hbm_to_vmem [thread:$0]  %s49, 6144, %s51, [#allocation6], 128, 128, 8
    $region17: #{tpu_custom_call.1} parent=1 // pred_fallthru
      _
    // Predicated region
    $region18: #{tpu_custom_call.1} parent=1 // pred_check
      _
    $region19: #{tpu_custom_call.1} parent=1 // pred_check_branch
      %58 = sbr.rel (0) target = $region21
    $region20: #{tpu_custom_call.1} parent=1 // pred_region
      %60 = vsyncadd [#allocation9], 0
      %s61 = sshll.u32 %s4, 4
      %s62 = int_to_ptr.hbm [resolvable:$true] %s61
      %s63 = sshll.u32 [#allocation8], 4
      %s64 = int_to_ptr.vmem [resolvable:$true] %s63
      %69 = dma.hbm_to_vmem [thread:$0]  %s62, 96, %s64, [#allocation9], 32, 32, 2
    $region21: #{tpu_custom_call.1} parent=1 // pred_fallthru
      _
    // Predicated region
    $region22: #{tpu_custom_call.1} parent=1 // pred_check
      _
    $region23: #{tpu_custom_call.1} parent=1 // pred_check_branch
      %71 = sbr.rel (0) target = $region25
    $region24: #{tpu_custom_call.1} parent=1 // pred_region
      %73 = vsyncadd [#allocation9], 0
      %s74 = sshll.u32 %s5, 4
      %s75 = int_to_ptr.hbm [resolvable:$true] %s74
      %s76 = sshll.u32 [#allocation10], 4
      %s77 = int_to_ptr.vmem [resolvable:$true] %s76
      %82 = dma.hbm_to_vmem [thread:$0]  %s75, 1024, %s77, [#allocation9], 64, 64, 4
    $region25: #{tpu_custom_call.1} parent=1 // pred_fallthru
      _
    // Predicated region
    $region26: #{tpu_custom_call.1} parent=1 // pred_check
      _
    $region27: #{tpu_custom_call.1} parent=1 // pred_check_branch
      %84 = sbr.rel (0) target = $region29
    $region28: #{tpu_custom_call.1} parent=1 // pred_region
      _
    $region29: #{tpu_custom_call.1} parent=1 // pred_fallthru
      _
    // Predicated region
    $region30: #{tpu_custom_call.1} parent=1 // pred_check
      _
    $region31: #{tpu_custom_call.1} parent=1 // pred_check_branch
      %86 = sbr.rel (0) target = $region33
    $region32: #{tpu_custom_call.1} parent=1 // pred_region
      %88 = dma.done [#allocation3], 128
    $region33: #{tpu_custom_call.1} parent=1 // pred_fallthru
      _
    // Predicated region
    $region34: #{tpu_custom_call.1} parent=1 // pred_check
      _
    $region35: #{tpu_custom_call.1} parent=1 // pred_check_branch
      %90 = sbr.rel (0) target = $region37
    $region36: #{tpu_custom_call.1} parent=1 // pred_region
      %92 = dma.done [#allocation6], 1024
    $region37: #{tpu_custom_call.1} parent=1 // pred_fallthru
      _
    // Predicated region
    $region38: #{tpu_custom_call.1} parent=1 // pred_check
      _
    $region39: #{tpu_custom_call.1} parent=1 // pred_check_branch
      %94 = sbr.rel (0) target = $region41
    $region40: #{tpu_custom_call.1} parent=1 // pred_region
      %96 = dma.done [#allocation6], 6144
    $region41: #{tpu_custom_call.1} parent=1 // pred_fallthru
      _
    // Predicated region
    $region42: #{tpu_custom_call.1} parent=1 // pred_check
      _
    $region43: #{tpu_custom_call.1} parent=1 // pred_check_branch
      %98 = sbr.rel (0) target = $region45
    $region44: #{tpu_custom_call.1} parent=1 // pred_region
      %100 = dma.done [#allocation9], 96
    $region45: #{tpu_custom_call.1} parent=1 // pred_fallthru
      _
    // Predicated region
    $region46: #{tpu_custom_call.1} parent=1 // pred_check
      _
    $region47: #{tpu_custom_call.1} parent=1 // pred_check_branch
      %102 = sbr.rel (0) target = $region49
    $region48: #{tpu_custom_call.1} parent=1 // pred_region
      %104 = dma.done [#allocation9], 1024
    $region49: #{tpu_custom_call.1} parent=1 // pred_fallthru
      _
    %v105 = vld [vmem:[#allocation2] sm:$0xf]
    %v106 = vld [vmem:[#allocation2 + $0x4] sm:$0xf]
    %v107 = vld [vmem:[#allocation5] sm:$0xf]
    %v108 = vld [vmem:[#allocation5 + $0x4] sm:$0xf]
    %v109 = vld [vmem:[#allocation5 + $0x8] sm:$0xf]
    %v110 = vld [vmem:[#allocation5 + $0xc] sm:$0xf]
    %v111 = vld [vmem:[#allocation5 + $0x10] sm:$0xf]
    %v112 = vld [vmem:[#allocation5 + $0x14] sm:$0xf]
    %v113 = vld [vmem:[#allocation5 + $0x18] sm:$0xf]
    %v114 = vld [vmem:[#allocation5 + $0x1c] sm:$0xf]
    %v115 = vld [vmem:[#allocation5 + $0x20] sm:$0xf]
    %v116 = vld [vmem:[#allocation5 + $0x24] sm:$0xf]
    %v117 = vld [vmem:[#allocation5 + $0x28] sm:$0xf]
    %v118 = vld [vmem:[#allocation5 + $0x2c] sm:$0xf]
    %v119 = vld [vmem:[#allocation5 + $0x30] sm:$0xf]
    %v120 = vld [vmem:[#allocation5 + $0x34] sm:$0xf]
    %v121 = vld [vmem:[#allocation5 + $0x38] sm:$0xf]
    %v122 = vld [vmem:[#allocation5 + $0x3c] sm:$0xf]
    %v123 = vld [vmem:[%s2] sm:$0x1]
    %v125 = vperm.slane %v123, 0
    %v129 = vunpack.c.l.b16 %v105
    %v130 = vunpack.c.l.b16 %v106
    %v131 = vpack.c.b16 %v130, %v129
    %v149 = vunpack.c.l.b16 %v107
    %v150 = vunpack.c.l.b16 %v108
    %v151 = vunpack.c.l.b16 %v109
    %v152 = vunpack.c.l.b16 %v110
    %v153 = vunpack.c.l.b16 %v111
    %v154 = vunpack.c.l.b16 %v112
    %v155 = vunpack.c.l.b16 %v113
    %v156 = vunpack.c.l.b16 %v114
    %v157 = vunpack.c.l.b16 %v115
    %v158 = vunpack.c.l.b16 %v116
    %v159 = vunpack.c.l.b16 %v117
    %v160 = vunpack.c.l.b16 %v118
    %v161 = vunpack.c.l.b16 %v119
    %v162 = vunpack.c.l.b16 %v120
    %v163 = vunpack.c.l.b16 %v121
    %v164 = vunpack.c.l.b16 %v122
    %v165 = vpack.c.b16 %v150, %v149
    %v166 = vpack.c.b16 %v152, %v151
    %v167 = vpack.c.b16 %v154, %v153
    %v168 = vpack.c.b16 %v156, %v155
    %v169 = vpack.c.b16 %v158, %v157
    %v170 = vpack.c.b16 %v160, %v159
    %v171 = vpack.c.b16 %v162, %v161
    %v172 = vpack.c.b16 %v164, %v163
    %181 = vmatpush.bf16.msra.mxu0 %v172
    %182 = vmatpush.bf16.msra.mxu0 %v171
    %183 = vmatpush.bf16.msra.mxu0 %v170
    %184 = vmatpush.bf16.msra.mxu0 %v169
    %185 = vmatpush.bf16.msra.mxu0 %v168
    %186 = vmatpush.bf16.msra.mxu0 %v167
    %187 = vmatpush.bf16.msra.mxu0 %v166
    %188 = vmatpush.bf16.msra.mxu0 %v165
    %189 = vmatmul.bf16.gmra.mxu0 %v131
    %v190 = vpop.f32.mrf.mxu0
    %v191 = vadd.f32 %v125, %v190
    %v192 = vpop.f32.mrf.mxu0
    %v193 = vadd.f32 %v125, %v192
    %194 = vdwg.mxu0
    %v195 = vmax.f32 %v191, 0.0
    %v196 = vmax.f32 %v193, 0.0
    %v197 = vpack.c.bf16 %v195, %v195
    %v198 = vpack.c.bf16 %v196, %v196
    loop: start=0, step=1, limit=3
    $region50: #{tpu_custom_call.1} parent=1 // loop_pre_header
      _
    $region51: #{tpu_custom_call.1} parent=1 // loop_header
      %s200 = sphi 0, %s204
      %p201 = scmp.ge.s32.totalorder %s200, 3
      %v205 = vphi %v195, %v394
      %v206 = vphi %v196, %v395
      %v207 = vphi %v197, %v396
      %v208 = vphi %v198, %v397
    $region52: #{tpu_custom_call.1} parent=1 // loop_header_branch
      %203 = sbr.rel (%p201) target = $region56
    $region53: #{tpu_custom_call.1} parent=1 // loop_body
      %s209 = smul.u32 %s200, 32
      %s210 = smul.addr %s209, 4
      %s211 = scalar_lea.vmem [#allocation7], %s210
      %v212 = vld [vmem:[%s211] sm:$0xff]
      %v213 = vld [vmem:[%s211 + $0x8] sm:$0xff]
      %v214 = vld [vmem:[%s211 + $0x10] sm:$0xff]
      %v215 = vld [vmem:[%s211 + $0x18] sm:$0xff]
      %v216 = vld [vmem:[%s211 + $0x20] sm:$0xff]
      %v217 = vld [vmem:[%s211 + $0x28] sm:$0xff]
      %v218 = vld [vmem:[%s211 + $0x30] sm:$0xff]
      %v219 = vld [vmem:[%s211 + $0x38] sm:$0xff]
      %v220 = vld [vmem:[%s211 + $0x40] sm:$0xff]
      %v221 = vld [vmem:[%s211 + $0x48] sm:$0xff]
      %v222 = vld [vmem:[%s211 + $0x50] sm:$0xff]
      %v223 = vld [vmem:[%s211 + $0x58] sm:$0xff]
      %v224 = vld [vmem:[%s211 + $0x60] sm:$0xff]
      %v225 = vld [vmem:[%s211 + $0x68] sm:$0xff]
      %v226 = vld [vmem:[%s211 + $0x70] sm:$0xff]
      %v227 = vld [vmem:[%s211 + $0x78] sm:$0xff]
      %s228 = smul.u32 %s200, 2
      %s229 = scalar_lea.vmem [#allocation8], %s228
      %v230 = vld [vmem:[%s229] sm:$0x3]
      %v232 = vperm.slane %v230, 0
      %v233 = vperm.slane %v230, 1
      %v238 = vunpack.c.l.b16 %v207
      %v239 = vunpack.c.l.b16 %v208
      %v240 = vpack.c.b16 %v239, %v238
      %v258 = vunpack.c.l.b16 %v212
      %v259 = vunpack.c.h.b16 %v212
      %v260 = vunpack.c.l.b16 %v213
      %v261 = vunpack.c.h.b16 %v213
      %v262 = vunpack.c.l.b16 %v214
      %v263 = vunpack.c.h.b16 %v214
      %v264 = vunpack.c.l.b16 %v215
      %v265 = vunpack.c.h.b16 %v215
      %v266 = vunpack.c.l.b16 %v216
      %v267 = vunpack.c.h.b16 %v216
      %v268 = vunpack.c.l.b16 %v217
      %v269 = vunpack.c.h.b16 %v217
      %v270 = vunpack.c.l.b16 %v218
      %v271 = vunpack.c.h.b16 %v218
      %v272 = vunpack.c.l.b16 %v219
      %v273 = vunpack.c.h.b16 %v219
      %v274 = vunpack.c.l.b16 %v220
      %v275 = vunpack.c.h.b16 %v220
      %v276 = vunpack.c.l.b16 %v221
      %v277 = vunpack.c.h.b16 %v221
      %v278 = vunpack.c.l.b16 %v222
      %v279 = vunpack.c.h.b16 %v222
      %v280 = vunpack.c.l.b16 %v223
      %v281 = vunpack.c.h.b16 %v223
      %v282 = vunpack.c.l.b16 %v224
      %v283 = vunpack.c.h.b16 %v224
      %v284 = vunpack.c.l.b16 %v225
      %v285 = vunpack.c.h.b16 %v225
      %v286 = vunpack.c.l.b16 %v226
      %v287 = vunpack.c.h.b16 %v226
      %v288 = vunpack.c.l.b16 %v227
      %v289 = vunpack.c.h.b16 %v227
      %v290 = vpack.c.b16 %v260, %v258
      %v291 = vpack.c.b16 %v261, %v259
      %v292 = vpack.c.b16 %v264, %v262
      %v293 = vpack.c.b16 %v265, %v263
      %v294 = vpack.c.b16 %v268, %v266
      %v295 = vpack.c.b16 %v269, %v267
      %v296 = vpack.c.b16 %v272, %v270
      %v297 = vpack.c.b16 %v273, %v271
      %v298 = vpack.c.b16 %v276, %v274
      %v299 = vpack.c.b16 %v277, %v275
      %v300 = vpack.c.b16 %v280, %v278
      %v301 = vpack.c.b16 %v281, %v279
      %v302 = vpack.c.b16 %v284, %v282
      %v303 = vpack.c.b16 %v285, %v283
      %v304 = vpack.c.b16 %v288, %v286
      %v305 = vpack.c.b16 %v289, %v287
      %322 = vmatpush.bf16.msra.mxu0 %v304
      %323 = vmatpush.bf16.msra.mxu0 %v302
      %324 = vmatpush.bf16.msra.mxu0 %v300
      %325 = vmatpush.bf16.msra.mxu0 %v298
      %326 = vmatpush.bf16.msra.mxu0 %v296
      %327 = vmatpush.bf16.msra.mxu0 %v294
      %328 = vmatpush.bf16.msra.mxu0 %v292
      %329 = vmatpush.bf16.msra.mxu0 %v290
      %330 = vmatmul.bf16.gmra.mxu0 %v240
      %v331 = vpop.f32.mrf.mxu0
      %v332 = vadd.f32 %v232, %v331
      %v333 = vpop.f32.mrf.mxu0
      %v334 = vadd.f32 %v232, %v333
      %335 = vdwg.mxu0
      %336 = vmatpush.bf16.msra.mxu0 %v305
      %337 = vmatpush.bf16.msra.mxu0 %v303
      %338 = vmatpush.bf16.msra.mxu0 %v301
      %339 = vmatpush.bf16.msra.mxu0 %v299
      %340 = vmatpush.bf16.msra.mxu0 %v297
      %341 = vmatpush.bf16.msra.mxu0 %v295
      %342 = vmatpush.bf16.msra.mxu0 %v293
      %343 = vmatpush.bf16.msra.mxu0 %v291
      %344 = vmatmul.bf16.gmra.mxu0 %v240
      %v345 = vpop.f32.mrf.mxu0
      %v346 = vadd.f32 %v233, %v345
      %v347 = vpop.f32.mrf.mxu0
      %v348 = vadd.f32 %v233, %v347
      %349 = vdwg.mxu0
      %v350 = vxor.u32 %v346, 2147483648
      %v351 = vxor.u32 %v348, 2147483648
      %v352 = vmul.f32 %v350, 1.442695
      %v353 = vpow.pop %v352
      %v354 = vmul.f32 %v351, 1.442695
      %v355 = vpow.pop %v354
      %v356 = vadd.f32 %v353, 1.0
      %v357 = vadd.f32 %v355, 1.0
      %v358 = vrcp.pop %v356
      %v359 = vmul.f32 %v356, %v358
      %v360 = vsub.f32 1.0, %v359
      %v361 = vmul.f32 %v358, %v360
      %v362 = vadd.f32 %v358, %v361
      %vm363 = vweird.f32 %v356
      %vm364 = vweird.f32 %v358
      %vm365 = vmor %vm363, %vm364
      %v366 = vsel %vm365, %v358, %v362
      %v367 = vand.u32 2147483647, %v356
      %vm368 = vcmp.eq.f32.partialorder %v367, 8.507059e+37
      %v369 = vand.u32 %v356, 2147483648
      %v370 = vor.u32 1.1754944e-38, %v369
      %v371 = vsel %vm368, %v370, %v366
      %v372 = vmul.f32 1.0, %v371
      %v373 = vrcp.pop %v357
      %v374 = vmul.f32 %v357, %v373
      %v375 = vsub.f32 1.0, %v374
      %v376 = vmul.f32 %v373, %v375
      %v377 = vadd.f32 %v373, %v376
      %vm378 = vweird.f32 %v357
      %vm379 = vweird.f32 %v373
      %vm380 = vmor %vm378, %vm379
      %v381 = vsel %vm380, %v373, %v377
      %v382 = vand.u32 2147483647, %v357
      %vm383 = vcmp.eq.f32.partialorder %v382, 8.507059e+37
      %v384 = vand.u32 %v357, 2147483648
      %v385 = vor.u32 1.1754944e-38, %v384
      %v386 = vsel %vm383, %v385, %v381
      %v387 = vmul.f32 1.0, %v386
      %v388 = vmax.f32 %v332, 0.0
      %v389 = vmax.f32 %v334, 0.0
      %v390 = vsub.f32 %v388, %v205
      %v391 = vsub.f32 %v389, %v206
      %v392 = vmul.f32 %v372, %v390
      %v393 = vmul.f32 %v387, %v391
      %v394 = vadd.f32 %v205, %v392
      %v395 = vadd.f32 %v206, %v393
      %v396 = vpack.c.bf16 %v394, %v394
      %v397 = vpack.c.bf16 %v395, %v395
    $region54: #{tpu_custom_call.1} parent=1 // loop_footer
      %s204 = sadd.s32 1, %s200
    $region55: #{tpu_custom_call.1} parent=1 // loop_footer_branch
      %199 = sbr.rel target = $region51
    $region56: #{tpu_custom_call.1} parent=1 // loop_exit
      _
    %v398 = vld [vmem:[#allocation10] sm:$0xf]
    %v399 = vld [vmem:[#allocation10 + $0x4] sm:$0xf]
    %v400 = vld [vmem:[#allocation10 + $0x8] sm:$0xf]
    %v401 = vld [vmem:[#allocation10 + $0xc] sm:$0xf]
    %v402 = vld [vmem:[#allocation10 + $0x10] sm:$0xf]
    %v403 = vld [vmem:[#allocation10 + $0x14] sm:$0xf]
    %v404 = vld [vmem:[#allocation10 + $0x18] sm:$0xf]
    %v405 = vld [vmem:[#allocation10 + $0x1c] sm:$0xf]
    %v406 = vld [vmem:[#allocation10 + $0x20] sm:$0xf]
    %v407 = vld [vmem:[#allocation10 + $0x24] sm:$0xf]
    %v408 = vld [vmem:[#allocation10 + $0x28] sm:$0xf]
    %v409 = vld [vmem:[#allocation10 + $0x2c] sm:$0xf]
    %v410 = vld [vmem:[#allocation10 + $0x30] sm:$0xf]
    %v411 = vld [vmem:[#allocation10 + $0x34] sm:$0xf]
    %v412 = vld [vmem:[#allocation10 + $0x38] sm:$0xf]
    %v413 = vld [vmem:[#allocation10 + $0x3c] sm:$0xf]
    %v414 = vld [vmem:[%s6] sm:$0x1]
    %v416 = vperm.slane %v414, 0
    %v420 = vunpack.c.l.b16 %v207
    %v421 = vunpack.c.l.b16 %v208
    %v422 = vpack.c.b16 %v421, %v420
    %v440 = vunpack.c.l.b16 %v398
    %v441 = vunpack.c.l.b16 %v399
    %v442 = vunpack.c.l.b16 %v400
    %v443 = vunpack.c.l.b16 %v401
    %v444 = vunpack.c.l.b16 %v402
    %v445 = vunpack.c.l.b16 %v403
    %v446 = vunpack.c.l.b16 %v404
    %v447 = vunpack.c.l.b16 %v405
    %v448 = vunpack.c.l.b16 %v406
    %v449 = vunpack.c.l.b16 %v407
    %v450 = vunpack.c.l.b16 %v408
    %v451 = vunpack.c.l.b16 %v409
    %v452 = vunpack.c.l.b16 %v410
    %v453 = vunpack.c.l.b16 %v411
    %v454 = vunpack.c.l.b16 %v412
    %v455 = vunpack.c.l.b16 %v413
    %v456 = vpack.c.b16 %v441, %v440
    %v457 = vpack.c.b16 %v443, %v442
    %v458 = vpack.c.b16 %v445, %v444
    %v459 = vpack.c.b16 %v447, %v446
    %v460 = vpack.c.b16 %v449, %v448
    %v461 = vpack.c.b16 %v451, %v450
    %v462 = vpack.c.b16 %v453, %v452
    %v463 = vpack.c.b16 %v455, %v454
    %472 = vmatpush.bf16.msra.mxu0 %v463
    %473 = vmatpush.bf16.msra.mxu0 %v462
    %474 = vmatpush.bf16.msra.mxu0 %v461
    %475 = vmatpush.bf16.msra.mxu0 %v460
    %476 = vmatpush.bf16.msra.mxu0 %v459
    %477 = vmatpush.bf16.msra.mxu0 %v458
    %478 = vmatpush.bf16.msra.mxu0 %v457
    %479 = vmatpush.bf16.msra.mxu0 %v456
    %480 = vmatmul.bf16.gmra.mxu0 %v422
    %v481 = vpop.f32.mrf.mxu0
    %v482 = vadd.f32 %v416, %v481
    %v483 = vpop.f32.mrf.mxu0
    %v484 = vadd.f32 %v416, %v483
    %485 = vdwg.mxu0
    %486 = vmax.xlane.f32.xlu0 %v482
    %v487 = vpop.xlane.xlu0 %486
    %488 = vmax.xlane.f32.xlu0 %v484
    %v489 = vpop.xlane.xlu0 %488
    %v490 = vsub.f32 %v482, %v487
    %v491 = vsub.f32 %v484, %v489
    %v492 = vmul.f32 %v490, 1.442695
    %v493 = vpow.pop %v492
    %v494 = vmul.f32 %v491, 1.442695
    %v495 = vpow.pop %v494
    %496 = vadd.xlane.f32.xlu0 %v493
    %v497 = vpop.xlane.xlu0 %496
    %498 = vadd.xlane.f32.xlu0 %v495
    %v499 = vpop.xlane.xlu0 %498
    %v500 = vrcp.pop %v497
    %v501 = vmul.f32 %v497, %v500
    %v502 = vsub.f32 1.0, %v501
    %v503 = vmul.f32 %v500, %v502
    %v504 = vadd.f32 %v500, %v503
    %vm505 = vweird.f32 %v497
    %vm506 = vweird.f32 %v500
    %vm507 = vmor %vm505, %vm506
    %v508 = vsel %vm507, %v500, %v504
    %v509 = vand.u32 2147483647, %v497
    %vm510 = vcmp.eq.f32.partialorder %v509, 8.507059e+37
    %v511 = vand.u32 %v497, 2147483648
    %v512 = vor.u32 1.1754944e-38, %v511
    %v513 = vsel %vm510, %v512, %v508
    %v514 = vmul.f32 %v493, %v513
    %v515 = vrcp.pop %v499
    %v516 = vmul.f32 %v499, %v515
    %v517 = vsub.f32 1.0, %v516
    %v518 = vmul.f32 %v515, %v517
    %v519 = vadd.f32 %v515, %v518
    %vm520 = vweird.f32 %v499
    %vm521 = vweird.f32 %v515
    %vm522 = vmor %vm520, %vm521
    %v523 = vsel %vm522, %v515, %v519
    %v524 = vand.u32 2147483647, %v499
    %vm525 = vcmp.eq.f32.partialorder %v524, 8.507059e+37
    %v526 = vand.u32 %v499, 2147483648
    %v527 = vor.u32 1.1754944e-38, %v526
    %v528 = vsel %vm525, %v527, %v523
    %v529 = vmul.f32 %v495, %v528
    %530 = vst [vmem:[#allocation11] sm:$0xff] %v514
    %531 = vst [vmem:[#allocation11 + $0x8] sm:$0xff] %v529
    // Predicated region
    $region57: #{tpu_custom_call.1} parent=1 // pred_check
      _
    $region58: #{tpu_custom_call.1} parent=1 // pred_check_branch
      %533 = sbr.rel (0) target = $region60
    $region59: #{tpu_custom_call.1} parent=1 // pred_region
      %535 = vsyncadd [#allocation4], 0
      %s536 = sshll.u32 [#allocation11], 4
      %s537 = int_to_ptr.vmem [resolvable:$true] %s536
      %s538 = sshll.u32 %s7, 4
      %s539 = int_to_ptr.hbm [resolvable:$true] %s538
      %544 = dma.vmem_to_hbm [thread:$0]  %s537, 256, %s539, [#allocation4], 128, 128, 8
    $region60: #{tpu_custom_call.1} parent=1 // pred_fallthru
      _
    // Predicated region
    $region61: #{tpu_custom_call.1} parent=1 // pred_check
      _
    $region62: #{tpu_custom_call.1} parent=1 // pred_check_branch
      %546 = sbr.rel (0) target = $region64
    $region63: #{tpu_custom_call.1} parent=1 // pred_region
      %548 = dma.done [#allocation4], 256
    $region64: #{tpu_custom_call.1} parent=1 // pred_fallthru
      _
    %549 = vsyncpa [#allocation3], 1
    %550 = vsyncpa [#allocation6], 1
    %551 = vsyncpa [#allocation9], 1
    %552 = vsyncpa [#allocation4], 1

</llo_original>
